<compile_context>
chip_gen: v7x
topology: tpu7x:2x2x1
jax: 0.10.0
libtpu: 0.0.40
codegen_flags: <defaults>
</compile_context>

<pallas_src>
import jax
import jax.numpy as jnp
from jax.experimental import pallas as pl
from jax.experimental.pallas import tpu as pltpu


# ------------------------------- Pallas kernel -------------------------------

def _ipd_kernel(z_rows_ref, z_cols_ref, adj_ref):
    """adj_tile = sigmoid(z_rows @ z_cols.T), fused on one VMEM tile."""
    logits = jax.lax.dot_general(
        z_rows_ref[...], z_cols_ref[...],
        dimension_numbers=(((1,), (1,)), ((), ())),   # contract feature axis (no XLU transpose)
        preferred_element_type=jnp.float32,           # f32 MXU accumulation
    )
    # sigmoid(x) = 1 / (1 + exp(-x)); exp and the reciprocal both live on the
    # EUP slot, so no VPU Newton-refined divide in the epilogue.
    adj = pl.reciprocal(1.0 + jnp.exp(-logits), approx=True)
    adj_ref[...] = adj.astype(adj_ref.dtype)


# --------------------------------- wrapper -----------------------------------

def inner_product_decoder(
    z,
    *,
    dropout: float = 0.0,
    training: bool = False,
    rng=None,
    tm: int = 256,                 # output row-tile (sublane) size
    tn: int = 1024,                # output col-tile (lane) size, streaming plan only
    out_dtype=jnp.float32,         # jnp.bfloat16 halves the dominant N^2 writeback
    bf16_matmul: bool = False,     # bf16 MXU operands (f32 accumulate); off by default
                                   # to stay bit-close to the torch f32 reference
    vmem_budget_bytes: int = 40 * 1024 * 1024,   # per-TC budget (sized for v7x 64 MiB)
):
    """adj = sigmoid(dropout(z) @ dropout(z).T), matching InnerProductDecoder.forward."""
    z = jnp.asarray(z, jnp.float32)
    N, D = z.shape

    # F.dropout: identity in eval mode; inverted dropout in training mode.
    # TODO(synk): training-mode dropout uses JAX RNG, so it will not reproduce
    # torch's RNG stream bit-for-bit (semantics / scaling are identical).
    if training and dropout > 0.0:
        if rng is None:
            rng = jax.random.PRNGKey(0)
        keep = jax.random.bernoulli(rng, 1.0 - dropout, z.shape)
        z = jnp.where(keep, z / (1.0 - dropout), 0.0)

    compute_dtype = jnp.bfloat16 if bf16_matmul else jnp.float32
    z_op = z.astype(compute_dtype)   # single wrapper-side cast (no per-tile VPU casts)

    c_bytes = jnp.dtype(compute_dtype).itemsize
    o_bytes = jnp.dtype(out_dtype).itemsize

    # Block shapes are either multiples of (8, 128) or the full array dim, so
    # all specs are valid for any N; ragged last blocks get masked stores.
    tm_eff = N if tm >= N else tm
    lane_pad = pl.cdiv(N, 128) * 128     # lane padding of an (.., N) VMEM tile

    # VMEM needed for plan A (2x = double buffering of pipelined operands).
    resident_need = (
        2 * N * D * c_bytes              # whole z kept resident (column operand)
        + 2 * tm_eff * D * c_bytes       # streamed row tiles
        + 2 * tm_eff * lane_pad * o_bytes  # (tm, N) output row stripe
    )

    if resident_need <= vmem_budget_bytes:
        # ---- Plan A: z fully VMEM-resident, 1-D grid over output row stripes.
        grid = (pl.cdiv(N, tm_eff),)
        in_specs = [
            pl.BlockSpec((tm_eff, D), lambda i: (i, 0)),   # row tile, streamed
            pl.BlockSpec((N, D), lambda i: (0, 0)),        # whole z, single DMA
        ]
        out_specs = pl.BlockSpec((tm_eff, N), lambda i: (i, 0))  # lane-dense stripe
        dim_sem = ("parallel",)
    else:
        # ---- Plan B: streaming 2-D (row, col) grid for very large N.
        tn_eff = N if tn >= N else tn
        grid = (pl.cdiv(N, tm_eff), pl.cdiv(N, tn_eff))
        in_specs = [
            # Row tile: constant across j -> stays VMEM-resident while columns stream.
            pl.BlockSpec((tm_eff, D), lambda i, j: (i, 0)),
            pl.BlockSpec((tn_eff, D), lambda i, j: (j, 0)),
        ]
        out_specs = pl.BlockSpec((tm_eff, tn_eff), lambda i, j: (i, j))
        dim_sem = ("parallel", "parallel")

    return pl.pallas_call(
        _ipd_kernel,
        out_shape=jax.ShapeDtypeStruct((N, N), out_dtype),
        grid=grid,
        in_specs=in_specs,
        out_specs=out_specs,
        compiler_params=pltpu.CompilerParams(
            # Independent output tiles -> all axes parallel (megacore on v7x).
            dimension_semantics=dim_sem,
            # 48 MiB is safe per-TC on v5e/v6e (128 MiB VMEM) and v7x (64 MiB).
            vmem_limit_bytes=48 * 1024 * 1024,
        ),
    )(z_op, z_op)


# ----------------------------------- main ------------------------------------

if __name__ == "__main__":
    # Small shapes implied by the module: z is (num_nodes, hidden).
    # N deliberately NOT a multiple of 128 to exercise the ragged-edge handling.
    N, D = 200, 32

    key = jax.random.PRNGKey(0)
    z = jax.random.normal(key, (N, D), jnp.float32)

    # Reference (plain XLA).
    logits_ref = jnp.dot(z, z.T, precision=jax.lax.Precision.HIGHEST)
    adj_ref = jax.nn.sigmoid(logits_ref)

    def check(adj, name):
        jax.block_until_ready(adj)
        assert adj.shape == (N, N), name
        assert bool(jnp.isfinite(adj).all()), name
        # Loose range check (approx reciprocal may overshoot 1.0 by ~1e-4).
        assert bool(((adj >= -1e-3) & (adj <= 1.0 + 1e-3)).all()), name
        err = float(jnp.max(jnp.abs(adj.astype(jnp.float32) - adj_ref)))
        assert err < 5e-3, f"{name}: max abs diff {err}"

    # Plan A (default for this size): z fully VMEM-resident, (tm, N) row-stripe output.
    adj_resident = inner_product_decoder(z)          # eval mode: dropout is identity
    check(adj_resident, "resident")

    # Plan B: force the streaming 2-D-grid path (used automatically for very large N).
    adj_streaming = inner_product_decoder(z, vmem_budget_bytes=0)
    check(adj_streaming, "streaming")

    print("KERNEL_OK")
</pallas_src>

<mosaic_0001>
module attributes {stable_mosaic.version = 11 : i64} {
  func.func @_ipd_kernel(%arg0: i32, %arg1: memref<200x32xf32, #tpu.memory_space<vmem>>, %arg2: memref<200x32xf32, #tpu.memory_space<vmem>>, %arg3: memref<200x200xf32, #tpu.memory_space<vmem>>) attributes {dimension_semantics = [#tpu.dimension_semantics<parallel>], iteration_bounds = array<i64: 1>, scalar_prefetch = 0 : i64, scratch_operands = 0 : i64, tpu.core_type = #tpu.core_type<tc>, window_params = [{transform_indices = @transform_0, window_bounds = array<i64: 200, 32>}, {pipeline_mode = #tpu.pipeline_mode<synchronous>, transform_indices = @transform_1, window_bounds = array<i64: 200, 32>}, {transform_indices = @transform_2, window_bounds = array<i64: 200, 200>}]} {
    %c0 = arith.constant 0 : index
    %c0_0 = arith.constant 0 : index
    %0 = vector.load %arg1[%c0, %c0_0] : memref<200x32xf32, #tpu.memory_space<vmem>>, vector<200x32xf32>
    %c0_1 = arith.constant 0 : index
    %c0_2 = arith.constant 0 : index
    %1 = vector.load %arg2[%c0_1, %c0_2] : memref<200x32xf32, #tpu.memory_space<vmem>>, vector<200x32xf32>
    %cst = arith.constant dense<0.000000e+00> : vector<200x200xf32>
    %2 = tpu.matmul %0, %1, %cst {dimension_numbers = #tpu.dot_dimension_numbers<[1], [1], [0], [0], [0, 0, 1, 0], [], []>} : vector<200x32xf32>, vector<200x32xf32>, vector<200x200xf32> -> vector<200x200xf32>
    %cst_3 = arith.constant 0.000000e+00 : f32
    %3 = vector.broadcast %cst_3 : f32 to vector<200x200xf32>
    %4 = arith.subf %3, %2 : vector<200x200xf32>
    %5 = math.exp %4 : vector<200x200xf32>
    %cst_4 = arith.constant 1.000000e+00 : f32
    %6 = vector.broadcast %cst_4 : f32 to vector<200x200xf32>
    %7 = arith.addf %6, %5 : vector<200x200xf32>
    %8 = tpu.reciprocal %7 {approx = true} : vector<200x200xf32> -> vector<200x200xf32>
    %c0_5 = arith.constant 0 : index
    %c0_6 = arith.constant 0 : index
    %9 = vector.load %arg3[%c0_5, %c0_6] : memref<200x200xf32, #tpu.memory_space<vmem>>, vector<200x200xf32>
    tpu.vector_store %arg3[%c0_5, %c0_6], %8 {strides = array<i32>} : memref<200x200xf32, #tpu.memory_space<vmem>>, vector<200x200xf32>,
    return
  }
  func.func @transform_0(%arg0: i32) -> (i32, i32) {
    %c0_i32 = arith.constant 0 : i32
    %c0_i32_0 = arith.constant 0 : i32
    return %arg0, %c0_i32 : i32, i32
  }
  func.func @transform_1(%arg0: i32) -> (i32, i32) {
    %c0_i32 = arith.constant 0 : i32
    %c0_i32_0 = arith.constant 0 : i32
    %c0_i32_1 = arith.constant 0 : i32
    return %c0_i32, %c0_i32_0 : i32, i32
  }
  func.func @transform_2(%arg0: i32) -> (i32, i32) {
    %c0_i32 = arith.constant 0 : i32
    %c0_i32_0 = arith.constant 0 : i32
    return %arg0, %c0_i32 : i32, i32
  }
}

</mosaic_0001>

<llo_original>
// kernel: tpu_custom_call.1
$region0: #{tpu_custom_call.1}
  #allocation0 [shape = 'u32[]', space=smem, size = 0x4, offset = 0x4, fixed_abs, tag = 'smem constant byte address 0x4 - core index']
  #allocation1 [shape = 'u32[144,128]{1,0:T(1,128)}', space=vmem, size = 0x12000, scoped, tag = 'internal scratch']
  %s0 = inlined_call_operand.vmem [shape: f32[200,32], index: 0, kind: input, shape index: {}]
  %s1 = inlined_call_operand.vmem [shape: f32[200,32], index: 1, kind: input, shape index: {}]
  %s2 = inlined_call_operand.hbm [shape: f32[200,200], index: 2, kind: output, shape index: {}]
  %s3 = sld [smem:[#allocation0]]
  $region18: #{tpu_custom_call.1} parent=0
    _
  %s5 = ssub.s32 1, %s3
  %s6 = scalar_select 0, %s5, %s3
  $region1: #{tpu_custom_call.1} parent=0
    #allocation2 [shape = 'u8[204800]{0}', space=vmem, size = 0x32000, scoped, tag = 'output window, operand 0, single buffered']
    #allocation3 [shape = 's32[1]{0}', space=sflag, size = 0x4, scoped, tag = 'scoped memory for tpu_custom_call.1']
    %7 = vsyncpa [#allocation3], 0
    // Predicated region
    $region2: #{tpu_custom_call.1} parent=1 // pred_check
      _
    $region3: #{tpu_custom_call.1} parent=1 // pred_check_branch
      %9 = sbr.rel (0) target = $region5
    $region4: #{tpu_custom_call.1} parent=1 // pred_region
      _
    $region5: #{tpu_custom_call.1} parent=1 // pred_fallthru
      _
    // Predicated region
    $region6: #{tpu_custom_call.1} parent=1 // pred_check
      _
    $region7: #{tpu_custom_call.1} parent=1 // pred_check_branch
      %11 = sbr.rel (0) target = $region9
    $region8: #{tpu_custom_call.1} parent=1 // pred_region
      _
    $region9: #{tpu_custom_call.1} parent=1 // pred_fallthru
      _
    %v12 = vld [vmem:[%s0] sm:$0xff]
    %v13 = vld [vmem:[%s0 + $0x8] sm:$0xff]
    %v14 = vld [vmem:[%s0 + $0x10] sm:$0xff]
    %v15 = vld [vmem:[%s0 + $0x18] sm:$0xff]
    %v16 = vld [vmem:[%s0 + $0x20] sm:$0xff]
    %v17 = vld [vmem:[%s0 + $0x28] sm:$0xff]
    %v18 = vld [vmem:[%s0 + $0x30] sm:$0xff]
    %v19 = vld [vmem:[%s0 + $0x38] sm:$0xff]
    %v20 = vld [vmem:[%s0 + $0x40] sm:$0xff]
    %v21 = vld [vmem:[%s0 + $0x48] sm:$0xff]
    %v22 = vld [vmem:[%s0 + $0x50] sm:$0xff]
    %v23 = vld [vmem:[%s0 + $0x58] sm:$0xff]
    %v24 = vld [vmem:[%s0 + $0x60] sm:$0xff]
    %v25 = vld [vmem:[%s0 + $0x68] sm:$0xff]
    %v26 = vld [vmem:[%s0 + $0x70] sm:$0xff]
    %v27 = vld [vmem:[%s0 + $0x78] sm:$0xff]
    %v28 = vld [vmem:[%s0 + $0x80] sm:$0xff]
    %v29 = vld [vmem:[%s0 + $0x88] sm:$0xff]
    %v30 = vld [vmem:[%s0 + $0x90] sm:$0xff]
    %v31 = vld [vmem:[%s0 + $0x98] sm:$0xff]
    %v32 = vld [vmem:[%s0 + $0xa0] sm:$0xff]
    %v33 = vld [vmem:[%s0 + $0xa8] sm:$0xff]
    %v34 = vld [vmem:[%s0 + $0xb0] sm:$0xff]
    %v35 = vld [vmem:[%s0 + $0xb8] sm:$0xff]
    %v36 = vld [vmem:[%s0 + $0xc0] sm:$0xff]
    %v37 = vld [vmem:[%s1] sm:$0xff]
    %v38 = vld [vmem:[%s1 + $0x8] sm:$0xff]
    %v39 = vld [vmem:[%s1 + $0x10] sm:$0xff]
    %v40 = vld [vmem:[%s1 + $0x18] sm:$0xff]
    %v41 = vld [vmem:[%s1 + $0x20] sm:$0xff]
    %v42 = vld [vmem:[%s1 + $0x28] sm:$0xff]
    %v43 = vld [vmem:[%s1 + $0x30] sm:$0xff]
    %v44 = vld [vmem:[%s1 + $0x38] sm:$0xff]
    %v45 = vld [vmem:[%s1 + $0x40] sm:$0xff]
    %v46 = vld [vmem:[%s1 + $0x48] sm:$0xff]
    %v47 = vld [vmem:[%s1 + $0x50] sm:$0xff]
    %v48 = vld [vmem:[%s1 + $0x58] sm:$0xff]
    %v49 = vld [vmem:[%s1 + $0x60] sm:$0xff]
    %v50 = vld [vmem:[%s1 + $0x68] sm:$0xff]
    %v51 = vld [vmem:[%s1 + $0x70] sm:$0xff]
    %v52 = vld [vmem:[%s1 + $0x78] sm:$0xff]
    %v53 = vld [vmem:[%s1 + $0x80] sm:$0xff]
    %v54 = vld [vmem:[%s1 + $0x88] sm:$0xff]
    %v55 = vld [vmem:[%s1 + $0x90] sm:$0xff]
    %v56 = vld [vmem:[%s1 + $0x98] sm:$0xff]
    %v57 = vld [vmem:[%s1 + $0xa0] sm:$0xff]
    %v58 = vld [vmem:[%s1 + $0xa8] sm:$0xff]
    %v59 = vld [vmem:[%s1 + $0xb0] sm:$0xff]
    %v60 = vld [vmem:[%s1 + $0xb8] sm:$0xff]
    %v61 = vld [vmem:[%s1 + $0xc0] sm:$0xff]
    %vm62 = vcmask 261120
    %v64 = vsel %vm62, %v12, 0
    %v67 = vsel %vm62, %v13, 0
    %v70 = vsel %vm62, %v14, 0
    %v73 = vsel %vm62, %v15, 0
    %v76 = vsel %vm62, %v16, 0
    %v79 = vsel %vm62, %v17, 0
    %v82 = vsel %vm62, %v18, 0
    %v85 = vsel %vm62, %v19, 0
    %v88 = vsel %vm62, %v20, 0
    %v91 = vsel %vm62, %v21, 0
    %v94 = vsel %vm62, %v22, 0
    %v97 = vsel %vm62, %v23, 0
    %v100 = vsel %vm62, %v24, 0
    %v103 = vsel %vm62, %v25, 0
    %v106 = vsel %vm62, %v26, 0
    %v109 = vsel %vm62, %v27, 0
    %v112 = vsel %vm62, %v28, 0
    %v115 = vsel %vm62, %v29, 0
    %v118 = vsel %vm62, %v30, 0
    %v121 = vsel %vm62, %v31, 0
    %v124 = vsel %vm62, %v32, 0
    %v127 = vsel %vm62, %v33, 0
    %v130 = vsel %vm62, %v34, 0
    %v133 = vsel %vm62, %v35, 0
    %v136 = vsel %vm62, %v36, 0
    %v139 = vsel %vm62, %v37, 0
    %v142 = vsel %vm62, %v38, 0
    %v145 = vsel %vm62, %v39, 0
    %v148 = vsel %vm62, %v40, 0
    %v151 = vsel %vm62, %v41, 0
    %v154 = vsel %vm62, %v42, 0
    %v157 = vsel %vm62, %v43, 0
    %v160 = vsel %vm62, %v44, 0
    %v163 = vsel %vm62, %v45, 0
    %v166 = vsel %vm62, %v46, 0
    %v169 = vsel %vm62, %v47, 0
    %v172 = vsel %vm62, %v48, 0
    %v175 = vsel %vm62, %v49, 0
    %v178 = vsel %vm62, %v50, 0
    %v181 = vsel %vm62, %v51, 0
    %v184 = vsel %vm62, %v52, 0
    %v187 = vsel %vm62, %v53, 0
    %v190 = vsel %vm62, %v54, 0
    %v193 = vsel %vm62, %v55, 0
    %v196 = vsel %vm62, %v56, 0
    %v199 = vsel %vm62, %v57, 0
    %v202 = vsel %vm62, %v58, 0
    %v205 = vsel %vm62, %v59, 0
    %v208 = vsel %vm62, %v60, 0
    %v211 = vsel %vm62, %v61, 0
    %213 = vmatprep.subr.mxu0 0.0
    %214 = vmatpush1.xpose.msra.mxu0 %v139
    %215 = vmatprep.subr.mxu0 0.0
    %216 = vmatpush1.xpose.msra.mxu0 %v142
    %217 = vmatprep.subr.mxu0 0.0
    %218 = vmatpush1.xpose.msra.mxu0 %v145
    %219 = vmatprep.subr.mxu0 0.0
    %220 = vmatpush1.xpose.msra.mxu0 %v148
    %221 = vmatprep.subr.mxu0 0.0
    %222 = vmatpush1.xpose.msra.mxu0 %v151
    %223 = vmatprep.subr.mxu0 0.0
    %224 = vmatpush1.xpose.msra.mxu0 %v154
    %225 = vmatprep.subr.mxu0 0.0
    %226 = vmatpush1.xpose.msra.mxu0 %v157
    %227 = vmatprep.subr.mxu0 0.0
    %228 = vmatpush1.xpose.msra.mxu0 %v160
    %229 = vmatprep.subr.mxu0 0.0
    %230 = vmatpush1.xpose.msra.mxu0 %v163
    %231 = vmatprep.subr.mxu0 0.0
    %232 = vmatpush1.xpose.msra.mxu0 %v166
    %233 = vmatprep.subr.mxu0 0.0
    %234 = vmatpush1.xpose.msra.mxu0 %v169
    %235 = vmatprep.subr.mxu0 0.0
    %236 = vmatpush1.xpose.msra.mxu0 %v172
    %237 = vmatprep.subr.mxu0 0.0
    %238 = vmatpush1.xpose.msra.mxu0 %v175
    %239 = vmatprep.subr.mxu0 0.0
    %240 = vmatpush1.xpose.msra.mxu0 %v178
    %241 = vmatprep.subr.mxu0 0.0
    %242 = vmatpush1.xpose.msra.mxu0 %v181
    %243 = vmatprep.subr.mxu0 0.0
    %244 = vmatpush1.xpose.msra.mxu0 %v184
    %245 = vmatprep.subr.mxu0 0.0
    %246 = vmatpush1.xpose.msra.mxu0 %v187
    %247 = vmatprep.subr.mxu0 0.0
    %248 = vmatpush1.xpose.msra.mxu0 %v190
    %249 = vmatprep.subr.mxu0 0.0
    %250 = vmatpush1.xpose.msra.mxu0 %v193
    %251 = vmatprep.subr.mxu0 0.0
    %252 = vmatpush1.xpose.msra.mxu0 %v196
    %253 = vmatprep.subr.mxu0 0.0
    %254 = vmatpush1.xpose.msra.mxu0 %v199
    %255 = vmatprep.subr.mxu0 0.0
    %256 = vmatpush1.xpose.msra.mxu0 %v202
    %257 = vmatprep.subr.mxu0 0.0
    %258 = vmatpush1.xpose.msra.mxu0 %v205
    %259 = vmatprep.subr.mxu0 0.0
    %260 = vmatpush1.xpose.msra.mxu0 %v208
    %261 = vmatprep.subr.mxu0 0.0
    %262 = vmatpush1.xpose.msra.mxu0 %v211
    %263 = vmatprep.subr.mxu0 0.0
    %264 = vmatpush1.xpose.msra.mxu0 0.0
    %265 = vmatprep.subr.mxu0 0.0
    %266 = vmatpush1.xpose.msra.mxu0 0.0
    %267 = vmatprep.subr.mxu0 0.0
    %268 = vmatpush1.xpose.msra.mxu0 0.0
    %269 = vmatprep.subr.mxu0 0.0
    %270 = vmatpush1.xpose.msra.mxu0 0.0
    %271 = vmatprep.subr.mxu0 0.0
    %272 = vmatpush1.xpose.msra.mxu0 0.0
    %273 = vmatprep.subr.mxu0 0.0
    %274 = vmatpush1.xpose.msra.mxu0 0.0
    %275 = vmatprep.subr.mxu0 0.0
    %276 = vmatpush1.xpose.msra.mxu0 0.0
    %277 = vmatprep.mubr.f32.mxu0 0.0
    %278 = vmatmul.mubr.f32.gmra.mrb[0].mxu0 %v64
    %v279 = vpop.f32.mrb[0].mxu0
    %v280 = vadd.f32 0.0, %v279
    %v281 = vpop.f32.mrb[0].mxu0
    %v282 = vadd.f32 0.0, %v281
    %283 = vmatprep.mubr.f32.mxu0 0.0
    %284 = vmatmul.mubr.f32.gmra.mrb[0].mxu0 %v67
    %v285 = vpop.f32.mrb[0].mxu0
    %v286 = vadd.f32 0.0, %v285
    %v287 = vpop.f32.mrb[0].mxu0
    %v288 = vadd.f32 0.0, %v287
    %289 = vmatprep.mubr.f32.mxu0 0.0
    %290 = vmatmul.mubr.f32.gmra.mrb[0].mxu0 %v70
    %v291 = vpop.f32.mrb[0].mxu0
    %v292 = vadd.f32 0.0, %v291
    %v293 = vpop.f32.mrb[0].mxu0
    %v294 = vadd.f32 0.0, %v293
    %295 = vmatprep.mubr.f32.mxu0 0.0
    %296 = vmatmul.mubr.f32.gmra.mrb[0].mxu0 %v73
    %v297 = vpop.f32.mrb[0].mxu0
    %v298 = vadd.f32 0.0, %v297
    %v299 = vpop.f32.mrb[0].mxu0
    %v300 = vadd.f32 0.0, %v299
    %301 = vmatprep.mubr.f32.mxu0 0.0
    %302 = vmatmul.mubr.f32.gmra.mrb[0].mxu0 %v76
    %v303 = vpop.f32.mrb[0].mxu0
    %v304 = vadd.f32 0.0, %v303
    %v305 = vpop.f32.mrb[0].mxu0
    %v306 = vadd.f32 0.0, %v305
    %307 = vmatprep.mubr.f32.mxu0 0.0
    %308 = vmatmul.mubr.f32.gmra.mrb[0].mxu0 %v79
    %v309 = vpop.f32.mrb[0].mxu0
    %v310 = vadd.f32 0.0, %v309
    %v311 = vpop.f32.mrb[0].mxu0
    %v312 = vadd.f32 0.0, %v311
    %313 = vmatprep.mubr.f32.mxu0 0.0
    %314 = vmatmul.mubr.f32.gmra.mrb[0].mxu0 %v82
    %v315 = vpop.f32.mrb[0].mxu0
    %v316 = vadd.f32 0.0, %v315
    %v317 = vpop.f32.mrb[0].mxu0
    %v318 = vadd.f32 0.0, %v317
    %319 = vmatprep.mubr.f32.mxu0 0.0
    %320 = vmatmul.mubr.f32.gmra.mrb[0].mxu0 %v85
    %v321 = vpop.f32.mrb[0].mxu0
    %v322 = vadd.f32 0.0, %v321
    %v323 = vpop.f32.mrb[0].mxu0
    %v324 = vadd.f32 0.0, %v323
    %325 = vmatprep.mubr.f32.mxu0 0.0
    %326 = vmatmul.mubr.f32.gmra.mrb[0].mxu0 %v88
    %v327 = vpop.f32.mrb[0].mxu0
    %v328 = vadd.f32 0.0, %v327
    %v329 = vpop.f32.mrb[0].mxu0
    %v330 = vadd.f32 0.0, %v329
    %331 = vmatprep.mubr.f32.mxu0 0.0
    %332 = vmatmul.mubr.f32.gmra.mrb[0].mxu0 %v91
    %v333 = vpop.f32.mrb[0].mxu0
    %v334 = vadd.f32 0.0, %v333
    %v335 = vpop.f32.mrb[0].mxu0
    %v336 = vadd.f32 0.0, %v335
    %337 = vmatprep.mubr.f32.mxu0 0.0
    %338 = vmatmul.mubr.f32.gmra.mrb[0].mxu0 %v94
    %v339 = vpop.f32.mrb[0].mxu0
    %v340 = vadd.f32 0.0, %v339
    %v341 = vpop.f32.mrb[0].mxu0
    %v342 = vadd.f32 0.0, %v341
    %343 = vmatprep.mubr.f32.mxu0 0.0
    %344 = vmatmul.mubr.f32.gmra.mrb[0].mxu0 %v97
    %v345 = vpop.f32.mrb[0].mxu0
    %v346 = vadd.f32 0.0, %v345
    %v347 = vpop.f32.mrb[0].mxu0
    %v348 = vadd.f32 0.0, %v347
    %349 = vmatprep.mubr.f32.mxu0 0.0
    %350 = vmatmul.mubr.f32.gmra.mrb[0].mxu0 %v100
    %v351 = vpop.f32.mrb[0].mxu0
    %v352 = vadd.f32 0.0, %v351
    %v353 = vpop.f32.mrb[0].mxu0
    %v354 = vadd.f32 0.0, %v353
    %355 = vmatprep.mubr.f32.mxu0 0.0
    %356 = vmatmul.mubr.f32.gmra.mrb[0].mxu0 %v103
    %v357 = vpop.f32.mrb[0].mxu0
    %v358 = vadd.f32 0.0, %v357
    %v359 = vpop.f32.mrb[0].mxu0
    %v360 = vadd.f32 0.0, %v359
    %361 = vmatprep.mubr.f32.mxu0 0.0
    %362 = vmatmul.mubr.f32.gmra.mrb[0].mxu0 %v106
    %v363 = vpop.f32.mrb[0].mxu0
    %v364 = vadd.f32 0.0, %v363
    %v365 = vpop.f32.mrb[0].mxu0
    %v366 = vadd.f32 0.0, %v365
    %367 = vmatprep.mubr.f32.mxu0 0.0
    %368 = vmatmul.mubr.f32.gmra.mrb[0].mxu0 %v109
    %v369 = vpop.f32.mrb[0].mxu0
    %v370 = vadd.f32 0.0, %v369
    %v371 = vpop.f32.mrb[0].mxu0
    %v372 = vadd.f32 0.0, %v371
    %373 = vmatprep.mubr.f32.mxu0 0.0
    %374 = vmatmul.mubr.f32.gmra.mrb[0].mxu0 %v112
    %v375 = vpop.f32.mrb[0].mxu0
    %v376 = vadd.f32 0.0, %v375
    %v377 = vpop.f32.mrb[0].mxu0
    %v378 = vadd.f32 0.0, %v377
    %379 = vmatprep.mubr.f32.mxu0 0.0
    %380 = vmatmul.mubr.f32.gmra.mrb[0].mxu0 %v115
    %v381 = vpop.f32.mrb[0].mxu0
    %v382 = vadd.f32 0.0, %v381
    %v383 = vpop.f32.mrb[0].mxu0
    %v384 = vadd.f32 0.0, %v383
    %385 = vmatprep.mubr.f32.mxu0 0.0
    %386 = vmatmul.mubr.f32.gmra.mrb[0].mxu0 %v118
    %v387 = vpop.f32.mrb[0].mxu0
    %v388 = vadd.f32 0.0, %v387
    %v389 = vpop.f32.mrb[0].mxu0
    %v390 = vadd.f32 0.0, %v389
    %391 = vmatprep.mubr.f32.mxu0 0.0
    %392 = vmatmul.mubr.f32.gmra.mrb[0].mxu0 %v121
    %v393 = vpop.f32.mrb[0].mxu0
    %v394 = vadd.f32 0.0, %v393
    %v395 = vpop.f32.mrb[0].mxu0
    %v396 = vadd.f32 0.0, %v395
    %397 = vmatprep.mubr.f32.mxu0 0.0
    %398 = vmatmul.mubr.f32.gmra.mrb[0].mxu0 %v124
    %v399 = vpop.f32.mrb[0].mxu0
    %v400 = vadd.f32 0.0, %v399
    %v401 = vpop.f32.mrb[0].mxu0
    %v402 = vadd.f32 0.0, %v401
    %403 = vmatprep.mubr.f32.mxu0 0.0
    %404 = vmatmul.mubr.f32.gmra.mrb[0].mxu0 %v127
    %v405 = vpop.f32.mrb[0].mxu0
    %v406 = vadd.f32 0.0, %v405
    %v407 = vpop.f32.mrb[0].mxu0
    %v408 = vadd.f32 0.0, %v407
    %409 = vmatprep.mubr.f32.mxu0 0.0
    %410 = vmatmul.mubr.f32.gmra.mrb[0].mxu0 %v130
    %v411 = vpop.f32.mrb[0].mxu0
    %v412 = vadd.f32 0.0, %v411
    %v413 = vpop.f32.mrb[0].mxu0
    %v414 = vadd.f32 0.0, %v413
    %415 = vmatprep.mubr.f32.mxu0 0.0
    %416 = vmatmul.mubr.f32.gmra.mrb[0].mxu0 %v133
    %v417 = vpop.f32.mrb[0].mxu0
    %v418 = vadd.f32 0.0, %v417
    %v419 = vpop.f32.mrb[0].mxu0
    %v420 = vadd.f32 0.0, %v419
    %421 = vmatprep.mubr.f32.mxu0 0.0
    %422 = vmatmul.mubr.f32.gmra.mrb[0].mxu0 %v136
    %v423 = vpop.f32.mrb[0].mxu0
    %v424 = vadd.f32 0.0, %v423
    %v425 = vpop.f32.mrb[0].mxu0
    %v426 = vadd.f32 0.0, %v425
    %427 = vdwg.mxu0
    %v428 = vsub.f32 0.0, %v280
    %v429 = vsub.f32 0.0, %v282
    %v430 = vsub.f32 0.0, %v286
    %v431 = vsub.f32 0.0, %v288
    %v432 = vsub.f32 0.0, %v292
    %v433 = vsub.f32 0.0, %v294
    %v434 = vsub.f32 0.0, %v298
    %v435 = vsub.f32 0.0, %v300
    %v436 = vsub.f32 0.0, %v304
    %v437 = vsub.f32 0.0, %v306
    %v438 = vsub.f32 0.0, %v310
    %v439 = vsub.f32 0.0, %v312
    %v440 = vsub.f32 0.0, %v316
    %v441 = vsub.f32 0.0, %v318
    %v442 = vsub.f32 0.0, %v322
    %v443 = vsub.f32 0.0, %v324
    %v444 = vsub.f32 0.0, %v328
    %v445 = vsub.f32 0.0, %v330
    %v446 = vsub.f32 0.0, %v334
    %v447 = vsub.f32 0.0, %v336
    %v448 = vsub.f32 0.0, %v340
    %v449 = vsub.f32 0.0, %v342
    %v450 = vsub.f32 0.0, %v346
    %v451 = vsub.f32 0.0, %v348
    %v452 = vsub.f32 0.0, %v352
    %v453 = vsub.f32 0.0, %v354
    %v454 = vsub.f32 0.0, %v358
    %v455 = vsub.f32 0.0, %v360
    %v456 = vsub.f32 0.0, %v364
    %v457 = vsub.f32 0.0, %v366
    %v458 = vsub.f32 0.0, %v370
    %v459 = vsub.f32 0.0, %v372
    %v460 = vsub.f32 0.0, %v376
    %v461 = vsub.f32 0.0, %v378
    %v462 = vsub.f32 0.0, %v382
    %v463 = vsub.f32 0.0, %v384
    %v464 = vsub.f32 0.0, %v388
    %v465 = vsub.f32 0.0, %v390
    %v466 = vsub.f32 0.0, %v394
    %v467 = vsub.f32 0.0, %v396
    %v468 = vsub.f32 0.0, %v400
    %v469 = vsub.f32 0.0, %v402
    %v470 = vsub.f32 0.0, %v406
    %v471 = vsub.f32 0.0, %v408
    %v472 = vsub.f32 0.0, %v412
    %v473 = vsub.f32 0.0, %v414
    %v474 = vsub.f32 0.0, %v418
    %v475 = vsub.f32 0.0, %v420
    %v476 = vsub.f32 0.0, %v424
    %v477 = vsub.f32 0.0, %v426
    %v478 = vmul.f32 %v428, 1.442695
    %v479 = vpow.pop %v478
    %v480 = vmul.f32 %v429, 1.442695
    %v481 = vpow.pop %v480
    %v482 = vmul.f32 %v430, 1.442695
    %v483 = vpow.pop %v482
    %v484 = vmul.f32 %v431, 1.442695
    %v485 = vpow.pop %v484
    %v486 = vmul.f32 %v432, 1.442695
    %v487 = vpow.pop %v486
    %v488 = vmul.f32 %v433, 1.442695
    %v489 = vpow.pop %v488
    %v490 = vmul.f32 %v434, 1.442695
    %v491 = vpow.pop %v490
    %v492 = vmul.f32 %v435, 1.442695
    %v493 = vpow.pop %v492
    %v494 = vmul.f32 %v436, 1.442695
    %v495 = vpow.pop %v494
    %v496 = vmul.f32 %v437, 1.442695
    %v497 = vpow.pop %v496
    %v498 = vmul.f32 %v438, 1.442695
    %v499 = vpow.pop %v498
    %v500 = vmul.f32 %v439, 1.442695
    %v501 = vpow.pop %v500
    %v502 = vmul.f32 %v440, 1.442695
    %v503 = vpow.pop %v502
    %v504 = vmul.f32 %v441, 1.442695
    %v505 = vpow.pop %v504
    %v506 = vmul.f32 %v442, 1.442695
    %v507 = vpow.pop %v506
    %v508 = vmul.f32 %v443, 1.442695
    %v509 = vpow.pop %v508
    %v510 = vmul.f32 %v444, 1.442695
    %v511 = vpow.pop %v510
    %v512 = vmul.f32 %v445, 1.442695
    %v513 = vpow.pop %v512
    %v514 = vmul.f32 %v446, 1.442695
    %v515 = vpow.pop %v514
    %v516 = vmul.f32 %v447, 1.442695
    %v517 = vpow.pop %v516
    %v518 = vmul.f32 %v448, 1.442695
    %v519 = vpow.pop %v518
    %v520 = vmul.f32 %v449, 1.442695
    %v521 = vpow.pop %v520
    %v522 = vmul.f32 %v450, 1.442695
    %v523 = vpow.pop %v522
    %v524 = vmul.f32 %v451, 1.442695
    %v525 = vpow.pop %v524
    %v526 = vmul.f32 %v452, 1.442695
    %v527 = vpow.pop %v526
    %v528 = vmul.f32 %v453, 1.442695
    %v529 = vpow.pop %v528
    %v530 = vmul.f32 %v454, 1.442695
    %v531 = vpow.pop %v530
    %v532 = vmul.f32 %v455, 1.442695
    %v533 = vpow.pop %v532
    %v534 = vmul.f32 %v456, 1.442695
    %v535 = vpow.pop %v534
    %v536 = vmul.f32 %v457, 1.442695
    %v537 = vpow.pop %v536
    %v538 = vmul.f32 %v458, 1.442695
    %v539 = vpow.pop %v538
    %v540 = vmul.f32 %v459, 1.442695
    %v541 = vpow.pop %v540
    %v542 = vmul.f32 %v460, 1.442695
    %v543 = vpow.pop %v542
    %v544 = vmul.f32 %v461, 1.442695
    %v545 = vpow.pop %v544
    %v546 = vmul.f32 %v462, 1.442695
    %v547 = vpow.pop %v546
    %v548 = vmul.f32 %v463, 1.442695
    %v549 = vpow.pop %v548
    %v550 = vmul.f32 %v464, 1.442695
    %v551 = vpow.pop %v550
    %v552 = vmul.f32 %v465, 1.442695
    %v553 = vpow.pop %v552
    %v554 = vmul.f32 %v466, 1.442695
    %v555 = vpow.pop %v554
    %v556 = vmul.f32 %v467, 1.442695
    %v557 = vpow.pop %v556
    %v558 = vmul.f32 %v468, 1.442695
    %v559 = vpow.pop %v558
    %v560 = vmul.f32 %v469, 1.442695
    %v561 = vpow.pop %v560
    %v562 = vmul.f32 %v470, 1.442695
    %v563 = vpow.pop %v562
    %v564 = vmul.f32 %v471, 1.442695
    %v565 = vpow.pop %v564
    %v566 = vmul.f32 %v472, 1.442695
    %v567 = vpow.pop %v566
    %v568 = vmul.f32 %v473, 1.442695
    %v569 = vpow.pop %v568
    %v570 = vmul.f32 %v474, 1.442695
    %v571 = vpow.pop %v570
    %v572 = vmul.f32 %v475, 1.442695
    %v573 = vpow.pop %v572
    %v574 = vmul.f32 %v476, 1.442695
    %v575 = vpow.pop %v574
    %v576 = vmul.f32 %v477, 1.442695
    %v577 = vpow.pop %v576
    %v578 = vadd.f32 %v479, 1.0
    %v579 = vadd.f32 %v481, 1.0
    %v580 = vadd.f32 %v483, 1.0
    %v581 = vadd.f32 %v485, 1.0
    %v582 = vadd.f32 %v487, 1.0
    %v583 = vadd.f32 %v489, 1.0
    %v584 = vadd.f32 %v491, 1.0
    %v585 = vadd.f32 %v493, 1.0
    %v586 = vadd.f32 %v495, 1.0
    %v587 = vadd.f32 %v497, 1.0
    %v588 = vadd.f32 %v499, 1.0
    %v589 = vadd.f32 %v501, 1.0
    %v590 = vadd.f32 %v503, 1.0
    %v591 = vadd.f32 %v505, 1.0
    %v592 = vadd.f32 %v507, 1.0
    %v593 = vadd.f32 %v509, 1.0
    %v594 = vadd.f32 %v511, 1.0
    %v595 = vadd.f32 %v513, 1.0
    %v596 = vadd.f32 %v515, 1.0
    %v597 = vadd.f32 %v517, 1.0
    %v598 = vadd.f32 %v519, 1.0
    %v599 = vadd.f32 %v521, 1.0
    %v600 = vadd.f32 %v523, 1.0
    %v601 = vadd.f32 %v525, 1.0
    %v602 = vadd.f32 %v527, 1.0
    %v603 = vadd.f32 %v529, 1.0
    %v604 = vadd.f32 %v531, 1.0
    %v605 = vadd.f32 %v533, 1.0
    %v606 = vadd.f32 %v535, 1.0
    %v607 = vadd.f32 %v537, 1.0
    %v608 = vadd.f32 %v539, 1.0
    %v609 = vadd.f32 %v541, 1.0
    %v610 = vadd.f32 %v543, 1.0
    %v611 = vadd.f32 %v545, 1.0
    %v612 = vadd.f32 %v547, 1.0
    %v613 = vadd.f32 %v549, 1.0
    %v614 = vadd.f32 %v551, 1.0
    %v615 = vadd.f32 %v553, 1.0
    %v616 = vadd.f32 %v555, 1.0
    %v617 = vadd.f32 %v557, 1.0
    %v618 = vadd.f32 %v559, 1.0
    %v619 = vadd.f32 %v561, 1.0
    %v620 = vadd.f32 %v563, 1.0
    %v621 = vadd.f32 %v565, 1.0
    %v622 = vadd.f32 %v567, 1.0
    %v623 = vadd.f32 %v569, 1.0
    %v624 = vadd.f32 %v571, 1.0
    %v625 = vadd.f32 %v573, 1.0
    %v626 = vadd.f32 %v575, 1.0
    %v627 = vadd.f32 %v577, 1.0
    %v628 = vrcp.pop %v578
    %v629 = vrcp.pop %v579
    %v630 = vrcp.pop %v580
    %v631 = vrcp.pop %v581
    %v632 = vrcp.pop %v582
    %v633 = vrcp.pop %v583
    %v634 = vrcp.pop %v584
    %v635 = vrcp.pop %v585
    %v636 = vrcp.pop %v586
    %v637 = vrcp.pop %v587
    %v638 = vrcp.pop %v588
    %v639 = vrcp.pop %v589
    %v640 = vrcp.pop %v590
    %v641 = vrcp.pop %v591
    %v642 = vrcp.pop %v592
    %v643 = vrcp.pop %v593
    %v644 = vrcp.pop %v594
    %v645 = vrcp.pop %v595
    %v646 = vrcp.pop %v596
    %v647 = vrcp.pop %v597
    %v648 = vrcp.pop %v598
    %v649 = vrcp.pop %v599
    %v650 = vrcp.pop %v600
    %v651 = vrcp.pop %v601
    %v652 = vrcp.pop %v602
    %v653 = vrcp.pop %v603
    %v654 = vrcp.pop %v604
    %v655 = vrcp.pop %v605
    %v656 = vrcp.pop %v606
    %v657 = vrcp.pop %v607
    %v658 = vrcp.pop %v608
    %v659 = vrcp.pop %v609
    %v660 = vrcp.pop %v610
    %v661 = vrcp.pop %v611
    %v662 = vrcp.pop %v612
    %v663 = vrcp.pop %v613
    %v664 = vrcp.pop %v614
    %v665 = vrcp.pop %v615
    %v666 = vrcp.pop %v616
    %v667 = vrcp.pop %v617
    %v668 = vrcp.pop %v618
    %v669 = vrcp.pop %v619
    %v670 = vrcp.pop %v620
    %v671 = vrcp.pop %v621
    %v672 = vrcp.pop %v622
    %v673 = vrcp.pop %v623
    %v674 = vrcp.pop %v624
    %v675 = vrcp.pop %v625
    %v676 = vrcp.pop %v626
    %v677 = vrcp.pop %v627
    %678 = vst [vmem:[#allocation2] sm:$0xff] %v628
    %vm679 = vcmask 588800
    %680 = vst.msk [vmem:[#allocation2 + $0x8] sm:$0xff] %vm679, %v629
    %681 = vst [vmem:[#allocation2 + $0x10] sm:$0xff] %v630
    %682 = vst.msk [vmem:[#allocation2 + $0x18] sm:$0xff] %vm679, %v631
    %683 = vst [vmem:[#allocation2 + $0x20] sm:$0xff] %v632
    %684 = vst.msk [vmem:[#allocation2 + $0x28] sm:$0xff] %vm679, %v633
    %685 = vst [vmem:[#allocation2 + $0x30] sm:$0xff] %v634
    %686 = vst.msk [vmem:[#allocation2 + $0x38] sm:$0xff] %vm679, %v635
    %687 = vst [vmem:[#allocation2 + $0x40] sm:$0xff] %v636
    %688 = vst.msk [vmem:[#allocation2 + $0x48] sm:$0xff] %vm679, %v637
    %689 = vst [vmem:[#allocation2 + $0x50] sm:$0xff] %v638
    %690 = vst.msk [vmem:[#allocation2 + $0x58] sm:$0xff] %vm679, %v639
    %691 = vst [vmem:[#allocation2 + $0x60] sm:$0xff] %v640
    %692 = vst.msk [vmem:[#allocation2 + $0x68] sm:$0xff] %vm679, %v641
    %693 = vst [vmem:[#allocation2 + $0x70] sm:$0xff] %v642
    %694 = vst.msk [vmem:[#allocation2 + $0x78] sm:$0xff] %vm679, %v643
    %695 = vst [vmem:[#allocation2 + $0x80] sm:$0xff] %v644
    %696 = vst.msk [vmem:[#allocation2 + $0x88] sm:$0xff] %vm679, %v645
    %697 = vst [vmem:[#allocation2 + $0x90] sm:$0xff] %v646
    %698 = vst.msk [vmem:[#allocation2 + $0x98] sm:$0xff] %vm679, %v647
    %699 = vst [vmem:[#allocation2 + $0xa0] sm:$0xff] %v648
    %700 = vst.msk [vmem:[#allocation2 + $0xa8] sm:$0xff] %vm679, %v649
    %701 = vst [vmem:[#allocation2 + $0xb0] sm:$0xff] %v650
    %702 = vst.msk [vmem:[#allocation2 + $0xb8] sm:$0xff] %vm679, %v651
    %703 = vst [vmem:[#allocation2 + $0xc0] sm:$0xff] %v652
    %704 = vst.msk [vmem:[#allocation2 + $0xc8] sm:$0xff] %vm679, %v653
    %705 = vst [vmem:[#allocation2 + $0xd0] sm:$0xff] %v654
    %706 = vst.msk [vmem:[#allocation2 + $0xd8] sm:$0xff] %vm679, %v655
    %707 = vst [vmem:[#allocation2 + $0xe0] sm:$0xff] %v656
    %708 = vst.msk [vmem:[#allocation2 + $0xe8] sm:$0xff] %vm679, %v657
    %709 = vst [vmem:[#allocation2 + $0xf0] sm:$0xff] %v658
    %710 = vst.msk [vmem:[#allocation2 + $0xf8] sm:$0xff] %vm679, %v659
    %711 = vst [vmem:[#allocation2 + $0x100] sm:$0xff] %v660
    %712 = vst.msk [vmem:[#allocation2 + $0x108] sm:$0xff] %vm679, %v661
    %713 = vst [vmem:[#allocation2 + $0x110] sm:$0xff] %v662
    %714 = vst.msk [vmem:[#allocation2 + $0x118] sm:$0xff] %vm679, %v663
    %715 = vst [vmem:[#allocation2 + $0x120] sm:$0xff] %v664
    %716 = vst.msk [vmem:[#allocation2 + $0x128] sm:$0xff] %vm679, %v665
    %717 = vst [vmem:[#allocation2 + $0x130] sm:$0xff] %v666
    %718 = vst.msk [vmem:[#allocation2 + $0x138] sm:$0xff] %vm679, %v667
    %719 = vst [vmem:[#allocation2 + $0x140] sm:$0xff] %v668
    %720 = vst.msk [vmem:[#allocation2 + $0x148] sm:$0xff] %vm679, %v669
    %721 = vst [vmem:[#allocation2 + $0x150] sm:$0xff] %v670
    %722 = vst.msk [vmem:[#allocation2 + $0x158] sm:$0xff] %vm679, %v671
    %723 = vst [vmem:[#allocation2 + $0x160] sm:$0xff] %v672
    %724 = vst.msk [vmem:[#allocation2 + $0x168] sm:$0xff] %vm679, %v673
    %725 = vst [vmem:[#allocation2 + $0x170] sm:$0xff] %v674
    %726 = vst.msk [vmem:[#allocation2 + $0x178] sm:$0xff] %vm679, %v675
    %727 = vst [vmem:[#allocation2 + $0x180] sm:$0xff] %v676
    %728 = vst.msk [vmem:[#allocation2 + $0x188] sm:$0xff] %vm679, %v677
    // Predicated region
    $region10: #{tpu_custom_call.1} parent=1 // pred_check
      _
    $region11: #{tpu_custom_call.1} parent=1 // pred_check_branch
      %730 = sbr.rel (0) target = $region13
    $region12: #{tpu_custom_call.1} parent=1 // pred_region
      %s732 = ssub.s32 6400, 6400
      %733 = vsyncadd [#allocation3], %s732
      %s734 = sshll.u32 [#allocation2], 4
      %s735 = int_to_ptr.vmem [resolvable:$true] %s734
      %740 = dma.vmem_to_hbm [thread:$0]  %s735, 6400, %s2, [#allocation3], 256, 256, 16
    $region13: #{tpu_custom_call.1} parent=1 // pred_fallthru
      _
    // Predicated region
    $region14: #{tpu_custom_call.1} parent=1 // pred_check
      _
    $region15: #{tpu_custom_call.1} parent=1 // pred_check_branch
      %742 = sbr.rel (0) target = $region17
    $region16: #{tpu_custom_call.1} parent=1 // pred_region
      %743 = dma.done [#allocation3], 6400
    $region17: #{tpu_custom_call.1} parent=1 // pred_fallthru
      _
    %744 = vsyncpa [#allocation3], 1

</llo_original>
